<compile_context>
chip_gen: v5e
topology: v5e:2x2
jax: 0.10.0
libtpu: 0.0.40
codegen_flags: <defaults>
</compile_context>

<pallas_src>
import jax
import jax.numpy as jnp
from jax.experimental import pallas as pl
from jax.experimental.pallas import tpu as pltpu


def bpr_kernel(uidx_ref, pidx_ref, nidx_ref,     # (1, 1, TB) int32 index tiles
               utab_t_ref, itab_t_ref,           # (D, U), (D, I) f32 tables (transposed)
               pos_ref, neg_ref):                # (1, 1, TB) f32 outputs
    tb = uidx_ref.shape[-1]
    n_users = utab_t_ref.shape[-1]
    n_items = itab_t_ref.shape[-1]

    uidx = uidx_ref[...].reshape(1, tb)          # lane-major index rows
    pidx = pidx_ref[...].reshape(1, tb)
    nidx = nidx_ref[...].reshape(1, tb)

    utab_t = utab_t_ref[...]                     # (D, n_users) f32, VMEM resident
    itab_t = itab_t_ref[...]                     # (D, n_items) f32, VMEM resident

    def onehot_cols(idx_row, n_rows):
        # oh[e, t] = 1.0 if idx[t] == e else 0.0   -> (n_rows, tb)
        ids = jax.lax.broadcasted_iota(jnp.int32, (n_rows, tb), 0)
        return (ids == idx_row).astype(jnp.float32)

    # Row gather on the MXU with exact 0/1 weights: (D, E) @ (E, TB) -> (D, TB).
    u_t = jnp.dot(utab_t, onehot_cols(uidx, n_users), preferred_element_type=jnp.float32)
    p_t = jnp.dot(itab_t, onehot_cols(pidx, n_items), preferred_element_type=jnp.float32)
    n_t = jnp.dot(itab_t, onehot_cols(nidx, n_items), preferred_element_type=jnp.float32)

    # Per-sample dot products on the VPU/XLU; result is lane-major (1, TB),
    # so the lane-dense output store needs no transpose.
    pos_ref[...] = jnp.sum(u_t * p_t, axis=0, keepdims=True).reshape(1, 1, tb)
    neg_ref[...] = jnp.sum(u_t * n_t, axis=0, keepdims=True).reshape(1, 1, tb)


def bpr_forward(user_table, item_table, user_idx, pos_idx, neg_idx, *, tile=128):
    """Returns (pos_prediction, neg_prediction), each float32 of shape (B,)."""
    B = user_idx.shape[0]
    num_tiles = pl.cdiv(B, tile)
    b_pad = num_tiles * tile

    def prep_idx(idx):
        idx = idx.astype(jnp.int32)
        if b_pad != B:
            idx = jnp.pad(idx, (0, b_pad - B))   # pad with index 0 (valid row)
        return idx.reshape(num_tiles, 1, tile)   # lane-dense index tiles

    uidx = prep_idx(user_idx)
    pidx = prep_idx(pos_idx)
    nidx = prep_idx(neg_idx)

    # Transpose once in the wrapper so the latent dim sits on sublanes and the
    # entity / sample dims sit on lanes inside the kernel.
    utab_t = user_table.astype(jnp.float32).T    # (D, num_users)
    itab_t = item_table.astype(jnp.float32).T    # (D, num_items)
    # TODO(synk): if the tables grow beyond VMEM (esp. v7x's 64 MiB), switch to
    # a per-tile DMA gather instead of whole-table residency.

    idx_spec = pl.BlockSpec((1, 1, tile), lambda i: (i, 0, 0))
    utab_spec = pl.BlockSpec(utab_t.shape, lambda i: (0, 0))   # whole table, VMEM resident
    itab_spec = pl.BlockSpec(itab_t.shape, lambda i: (0, 0))   # single copy, reused for pos+neg
    out_spec = pl.BlockSpec((1, 1, tile), lambda i: (i, 0, 0))

    pos, neg = pl.pallas_call(
        bpr_kernel,
        out_shape=(jax.ShapeDtypeStruct((num_tiles, 1, tile), jnp.float32),
                   jax.ShapeDtypeStruct((num_tiles, 1, tile), jnp.float32)),
        grid_spec=pltpu.PrefetchScalarGridSpec(
            num_scalar_prefetch=0,
            grid=(num_tiles,),
            in_specs=[idx_spec, idx_spec, idx_spec, utab_spec, itab_spec],
            out_specs=(out_spec, out_spec),
        ),
        compiler_params=pltpu.CompilerParams(
            dimension_semantics=("parallel",)),   # batch tiles are independent (v7x 2-TC)
    )(uidx, pidx, nidx, utab_t, itab_t)

    return pos.reshape(b_pad)[:B], neg.reshape(b_pad)[:B]


if __name__ == "__main__":
    # Small, deterministic synthetic config (matches BPR.__init__ shapes).
    config = {"num_users": 64, "num_items": 128, "num_latent": 32, "loo_eval": True}
    B = 200  # exercises both multi-tile grid and tail padding (tile=128)

    key = jax.random.PRNGKey(0)
    k_u, k_i, k_bu, k_bp, k_bn = jax.random.split(key, 5)

    # torch.nn.init.normal_(weight, std=0.01) equivalents.
    user_table = 0.01 * jax.random.normal(
        k_u, (config["num_users"], config["num_latent"]), dtype=jnp.float32)
    item_table = 0.01 * jax.random.normal(
        k_i, (config["num_items"], config["num_latent"]), dtype=jnp.float32)

    user_idx = jax.random.randint(k_bu, (B,), 0, config["num_users"], dtype=jnp.int32)
    pos_idx = jax.random.randint(k_bp, (B,), 0, config["num_items"], dtype=jnp.int32)
    neg_idx = jax.random.randint(k_bn, (B,), 0, config["num_items"], dtype=jnp.int32)

    pos_pred, neg_pred = bpr_forward(user_table, item_table, user_idx, pos_idx, neg_idx)
    jax.block_until_ready((pos_pred, neg_pred))

    # Pure-JAX reference check (same semantics as the PyTorch forward).
    u_lat = user_table[user_idx]
    ref_pos = jnp.sum(u_lat * item_table[pos_idx], axis=-1)
    ref_neg = jnp.sum(u_lat * item_table[neg_idx], axis=-1)
    assert pos_pred.shape == (B,) and neg_pred.shape == (B,)
    assert jnp.allclose(pos_pred, ref_pos, atol=1e-5, rtol=1e-5), "pos mismatch"
    assert jnp.allclose(neg_pred, ref_neg, atol=1e-5, rtol=1e-5), "neg mismatch"

    print("KERNEL_OK")
</pallas_src>

<mosaic_0001>
module attributes {stable_mosaic.version = 11 : i64} {
  func.func @bpr_kernel(%arg0: i32, %arg1: memref<1x1x128xi32, #tpu.memory_space<vmem>>, %arg2: memref<1x1x128xi32, #tpu.memory_space<vmem>>, %arg3: memref<1x1x128xi32, #tpu.memory_space<vmem>>, %arg4: memref<32x64xf32, #tpu.memory_space<vmem>>, %arg5: memref<32x128xf32, #tpu.memory_space<vmem>>, %arg6: memref<1x1x128xf32, #tpu.memory_space<vmem>>, %arg7: memref<1x1x128xf32, #tpu.memory_space<vmem>>) attributes {dimension_semantics = [#tpu.dimension_semantics<parallel>], iteration_bounds = array<i64: 2>, scalar_prefetch = 0 : i64, scratch_operands = 0 : i64, tpu.core_type = #tpu.core_type<tc>, window_params = [{transform_indices = @transform_0, window_bounds = array<i64: 1, 1, 128>}, {transform_indices = @transform_1, window_bounds = array<i64: 1, 1, 128>}, {transform_indices = @transform_2, window_bounds = array<i64: 1, 1, 128>}, {pipeline_mode = #tpu.pipeline_mode<synchronous>, transform_indices = @transform_3, window_bounds = array<i64: 32, 64>}, {pipeline_mode = #tpu.pipeline_mode<synchronous>, transform_indices = @transform_4, window_bounds = array<i64: 32, 128>}, {transform_indices = @transform_5, window_bounds = array<i64: 1, 1, 128>}, {transform_indices = @transform_6, window_bounds = array<i64: 1, 1, 128>}]} {
    %c0 = arith.constant 0 : index
    %c0_0 = arith.constant 0 : index
    %c0_1 = arith.constant 0 : index
    %0 = vector.load %arg1[%c0, %c0_0, %c0_1] : memref<1x1x128xi32, #tpu.memory_space<vmem>>, vector<1x1x128xi32>
    %1 = vector.shape_cast %0 : vector<1x1x128xi32> to vector<1x128xi32>
    %c0_2 = arith.constant 0 : index
    %c0_3 = arith.constant 0 : index
    %c0_4 = arith.constant 0 : index
    %2 = vector.load %arg2[%c0_2, %c0_3, %c0_4] : memref<1x1x128xi32, #tpu.memory_space<vmem>>, vector<1x1x128xi32>
    %3 = vector.shape_cast %2 : vector<1x1x128xi32> to vector<1x128xi32>
    %c0_5 = arith.constant 0 : index
    %c0_6 = arith.constant 0 : index
    %c0_7 = arith.constant 0 : index
    %4 = vector.load %arg3[%c0_5, %c0_6, %c0_7] : memref<1x1x128xi32, #tpu.memory_space<vmem>>, vector<1x1x128xi32>
    %5 = vector.shape_cast %4 : vector<1x1x128xi32> to vector<1x128xi32>
    %c0_8 = arith.constant 0 : index
    %c0_9 = arith.constant 0 : index
    %6 = vector.load %arg4[%c0_8, %c0_9] : memref<32x64xf32, #tpu.memory_space<vmem>>, vector<32x64xf32>
    %c0_10 = arith.constant 0 : index
    %c0_11 = arith.constant 0 : index
    %7 = vector.load %arg5[%c0_10, %c0_11] : memref<32x128xf32, #tpu.memory_space<vmem>>, vector<32x128xf32>
    %8 = tpu.iota {dimensions = array<i32: 0>} : vector<64x128xi32>
    %9 = vector.broadcast %1 : vector<1x128xi32> to vector<64x128xi32>
    %10 = arith.cmpi eq, %8, %9 : vector<64x128xi32>
    %11 = arith.extui %10 : vector<64x128xi1> to vector<64x128xi32>
    %12 = arith.sitofp %11 : vector<64x128xi32> to vector<64x128xf32>
    %cst = arith.constant dense<0.000000e+00> : vector<32x128xf32>
    %13 = tpu.matmul %6, %12, %cst {dimension_numbers = #tpu.dot_dimension_numbers<[1], [0], [0], [1], [0, 0, 1, 1], [], []>} : vector<32x64xf32>, vector<64x128xf32>, vector<32x128xf32> -> vector<32x128xf32>
    %14 = tpu.iota {dimensions = array<i32: 0>} : vector<128x128xi32>
    %15 = vector.broadcast %3 : vector<1x128xi32> to vector<128x128xi32>
    %16 = arith.cmpi eq, %14, %15 : vector<128x128xi32>
    %17 = arith.extui %16 : vector<128x128xi1> to vector<128x128xi32>
    %18 = arith.sitofp %17 : vector<128x128xi32> to vector<128x128xf32>
    %cst_12 = arith.constant dense<0.000000e+00> : vector<32x128xf32>
    %19 = tpu.matmul %7, %18, %cst_12 {dimension_numbers = #tpu.dot_dimension_numbers<[1], [0], [0], [1], [0, 0, 1, 1], [], []>} : vector<32x128xf32>, vector<128x128xf32>, vector<32x128xf32> -> vector<32x128xf32>
    %20 = tpu.iota {dimensions = array<i32: 0>} : vector<128x128xi32>
    %21 = vector.broadcast %5 : vector<1x128xi32> to vector<128x128xi32>
    %22 = arith.cmpi eq, %20, %21 : vector<128x128xi32>
    %23 = arith.extui %22 : vector<128x128xi1> to vector<128x128xi32>
    %24 = arith.sitofp %23 : vector<128x128xi32> to vector<128x128xf32>
    %cst_13 = arith.constant dense<0.000000e+00> : vector<32x128xf32>
    %25 = tpu.matmul %7, %24, %cst_13 {dimension_numbers = #tpu.dot_dimension_numbers<[1], [0], [0], [1], [0, 0, 1, 1], [], []>} : vector<32x128xf32>, vector<128x128xf32>, vector<32x128xf32> -> vector<32x128xf32>
    %26 = arith.mulf %13, %19 : vector<32x128xf32>
    %cst_14 = arith.constant dense<0.000000e+00> : vector<128xf32>
    %27 = vector.multi_reduction <add>, %26, %cst_14 [0] : vector<32x128xf32> to vector<128xf32>
    %28 = vector.shape_cast %27 : vector<128xf32> to vector<1x128xf32>
    %29 = vector.shape_cast %28 : vector<1x128xf32> to vector<1x1x128xf32>
    %c0_15 = arith.constant 0 : index
    %c0_16 = arith.constant 0 : index
    %c0_17 = arith.constant 0 : index
    %30 = vector.load %arg6[%c0_15, %c0_16, %c0_17] : memref<1x1x128xf32, #tpu.memory_space<vmem>>, vector<1x1x128xf32>
    tpu.vector_store %arg6[%c0_15, %c0_16, %c0_17], %29 {strides = array<i32>} : memref<1x1x128xf32, #tpu.memory_space<vmem>>, vector<1x1x128xf32>,
    %31 = arith.mulf %13, %25 : vector<32x128xf32>
    %cst_18 = arith.constant dense<0.000000e+00> : vector<128xf32>
    %32 = vector.multi_reduction <add>, %31, %cst_18 [0] : vector<32x128xf32> to vector<128xf32>
    %33 = vector.shape_cast %32 : vector<128xf32> to vector<1x128xf32>
    %34 = vector.shape_cast %33 : vector<1x128xf32> to vector<1x1x128xf32>
    %c0_19 = arith.constant 0 : index
    %c0_20 = arith.constant 0 : index
    %c0_21 = arith.constant 0 : index
    %35 = vector.load %arg7[%c0_19, %c0_20, %c0_21] : memref<1x1x128xf32, #tpu.memory_space<vmem>>, vector<1x1x128xf32>
    tpu.vector_store %arg7[%c0_19, %c0_20, %c0_21], %34 {strides = array<i32>} : memref<1x1x128xf32, #tpu.memory_space<vmem>>, vector<1x1x128xf32>,
    return
  }
  func.func @transform_0(%arg0: i32) -> (i32, i32, i32) {
    %c0_i32 = arith.constant 0 : i32
    %c0_i32_0 = arith.constant 0 : i32
    %c0_i32_1 = arith.constant 0 : i32
    return %arg0, %c0_i32, %c0_i32_0 : i32, i32, i32
  }
  func.func @transform_1(%arg0: i32) -> (i32, i32, i32) {
    %c0_i32 = arith.constant 0 : i32
    %c0_i32_0 = arith.constant 0 : i32
    %c0_i32_1 = arith.constant 0 : i32
    return %arg0, %c0_i32, %c0_i32_0 : i32, i32, i32
  }
  func.func @transform_2(%arg0: i32) -> (i32, i32, i32) {
    %c0_i32 = arith.constant 0 : i32
    %c0_i32_0 = arith.constant 0 : i32
    %c0_i32_1 = arith.constant 0 : i32
    return %arg0, %c0_i32, %c0_i32_0 : i32, i32, i32
  }
  func.func @transform_3(%arg0: i32) -> (i32, i32) {
    %c0_i32 = arith.constant 0 : i32
    %c0_i32_0 = arith.constant 0 : i32
    %c0_i32_1 = arith.constant 0 : i32
    return %c0_i32, %c0_i32_0 : i32, i32
  }
  func.func @transform_4(%arg0: i32) -> (i32, i32) {
    %c0_i32 = arith.constant 0 : i32
    %c0_i32_0 = arith.constant 0 : i32
    %c0_i32_1 = arith.constant 0 : i32
    return %c0_i32, %c0_i32_0 : i32, i32
  }
  func.func @transform_5(%arg0: i32) -> (i32, i32, i32) {
    %c0_i32 = arith.constant 0 : i32
    %c0_i32_0 = arith.constant 0 : i32
    %c0_i32_1 = arith.constant 0 : i32
    return %arg0, %c0_i32, %c0_i32_0 : i32, i32, i32
  }
  func.func @transform_6(%arg0: i32) -> (i32, i32, i32) {
    %c0_i32 = arith.constant 0 : i32
    %c0_i32_0 = arith.constant 0 : i32
    %c0_i32_1 = arith.constant 0 : i32
    return %arg0, %c0_i32, %c0_i32_0 : i32, i32, i32
  }
}

</mosaic_0001>

<llo_original>
// kernel: tpu_custom_call.1
$region0: #{tpu_custom_call.1}
  #allocation0 [shape = 'u32[]', space=smem, size = 0x4, offset = 0x4, fixed_abs, tag = 'smem constant byte address 0x4 - core index']
  #allocation1 [shape = 'u32[72,128]{1,0:T(1,128)}', space=vmem, size = 0x9000, scoped, tag = 'internal scratch']
  %s0 = inlined_call_operand.hbm [shape: s32[2,1,128], index: 0, kind: input, shape index: {}]
  %s1 = inlined_call_operand.hbm [shape: s32[2,1,128], index: 1, kind: input, shape index: {}]
  %s2 = inlined_call_operand.hbm [shape: s32[2,1,128], index: 2, kind: input, shape index: {}]
  %s3 = inlined_call_operand.hbm [shape: f32[32,64], index: 3, kind: input, shape index: {}]
  %s4 = inlined_call_operand.hbm [shape: f32[32,128], index: 4, kind: input, shape index: {}]
  %s5 = inlined_call_operand.hbm [shape: f32[2,1,128], index: 5, kind: output, shape index: {0}]
  %s6 = inlined_call_operand.hbm [shape: f32[2,1,128], index: 6, kind: output, shape index: {1}]
  %7 = xla_tuple %s5, %s6
  %s8 = sld [smem:[#allocation0]]
  $region81: #{tpu_custom_call.1} parent=0
    _
  %s10 = ssub.s32 1, %s8
  %s11 = scalar_select 0, %s10, %s8
  $region1: #{tpu_custom_call.1} parent=0
    #allocation2 [shape = 'u8[1024]{0}', space=vmem, size = 0x400, scoped, tag = 'input window, operand 0']
    #allocation3 [shape = 's32[2]{0}', space=sflag, size = 0x8, scoped, tag = 'scoped memory for tpu_custom_call.1']
    #allocation4 [shape = 's32[2]{0}', space=sflag, size = 0x8, scoped, tag = 'scoped memory for tpu_custom_call.1']
    #allocation5 [shape = 'u8[1024]{0}', space=vmem, size = 0x400, scoped, tag = 'input window, operand 1']
    #allocation6 [shape = 's32[2]{0}', space=sflag, size = 0x8, scoped, tag = 'scoped memory for tpu_custom_call.1']
    #allocation7 [shape = 'u8[1024]{0}', space=vmem, size = 0x400, scoped, tag = 'input window, operand 2']
    #allocation8 [shape = 'u8[16384]{0}', space=vmem, size = 0x4000, scoped, tag = 'input window, operand 3, single buffered']
    #allocation9 [shape = 's32[1]{0}', space=sflag, size = 0x4, scoped, tag = 'scoped memory for tpu_custom_call.1']
    #allocation10 [shape = 'u8[16384]{0}', space=vmem, size = 0x4000, scoped, tag = 'input window, operand 4, single buffered']
    #allocation11 [shape = 'u8[1024]{0}', space=vmem, size = 0x400, scoped, tag = 'output window, operand 0']
    #allocation12 [shape = 'u8[1024]{0}', space=vmem, size = 0x400, scoped, tag = 'output window, operand 1']
    #allocation13 [shape = 's32[2]{0}', space=sflag, size = 0x8, scoped, tag = 'scoped memory for tpu_custom_call.1']
    %12 = vsyncpa [#allocation3], 0
    %s13 = scalar_lea.sflag [#allocation3], 1
    %14 = vsyncpa %s13, 0
    %15 = vsyncpa [#allocation6], 0
    %s16 = scalar_lea.sflag [#allocation6], 1
    %17 = vsyncpa %s16, 0
    %18 = vsyncpa [#allocation9], 0
    %19 = vsyncpa [#allocation4], 0
    %s20 = scalar_lea.sflag [#allocation4], 1
    %21 = vsyncpa %s20, 0
    %22 = vsyncpa [#allocation13], 0
    %s23 = scalar_lea.sflag [#allocation13], 1
    %24 = vsyncpa %s23, 0
    loop: start=0, step=1, limit=4
    $region2: #{tpu_custom_call.1} parent=1 // loop_pre_header
      _
    $region3: #{tpu_custom_call.1} parent=1 // loop_header
      %s26 = sphi 0, %s30
      %p27 = scmp.ge.s32.totalorder %s26, 4
      %s36 = sphi 0, %s38
      %s39 = sphi 0, %s36
      %s40 = sphi 0, %s39
      %s56 = sphi 0, %s40
      %s62 = sphi 0, %s64
      %s65 = sphi 0, %s62
      %s66 = sphi 0, %s65
      %s82 = sphi 0, %s66
      %s88 = sphi 0, %s90
      %s91 = sphi 0, %s88
      %s92 = sphi 0, %s91
      %s108 = sphi 0, %s92
      %s112 = sphi 0, %s112
      %s114 = sphi 0, %s112
      %s115 = sphi 0, %s114
      %s129 = sphi 0, %s115
      %s133 = sphi 0, %s133
      %s135 = sphi 0, %s133
      %s136 = sphi 0, %s135
      %s150 = sphi 0, %s136
      %s156 = sphi 0, %s158
      %s159 = sphi 0, %s156
      %s160 = sphi 0, %s159
      %s176 = sphi 0, %s160
      %s182 = sphi 0, %s184
      %s185 = sphi 0, %s182
      %s186 = sphi 0, %s185
      %s202 = sphi 0, %s186
    $region4: #{tpu_custom_call.1} parent=1 // loop_header_branch
      %29 = sbr.rel (%p27) target = $region8
    $region5: #{tpu_custom_call.1} parent=1 // loop_body
      %s31 = ssub.s32 %s26, 1
      %s32 = ssub.s32 %s26, 2
      %s33 = sadd.s32 %s26, 1
      %s34 = ssub.s32 %s26, %s33
      %p35 = scmp.eq.s32.totalorder %s34, 0
      %s37 = sadd.s32 %s36, 1
      %s38 = scalar_select %p35, %s36, %s37
      %p41 = pneg %p35
      %p42 = scmp.eq.s32.totalorder %s26, 1
      %p43 = por %p41, %p42
      %p44 = scmp.ne.s32.totalorder %s36, %s39
      %p45 = scmp.eq.s32.totalorder %s26, 0
      %p46 = por %p44, %p45
      %p47 = scmp.ne.s32.totalorder %s36, %s39
      %p48 = scmp.eq.s32.totalorder %s31, 1
      %p49 = por %p47, %p48
      %p50 = scmp.ne.s32.totalorder %s39, %s40
      %p51 = scmp.eq.s32.totalorder %s31, 0
      %p52 = por %p50, %p51
      %p53 = scmp.ne.s32.totalorder %s39, %s40
      %p54 = scmp.eq.s32.totalorder %s32, 1
      %p55 = por %p53, %p54
      %p57 = scmp.ne.s32.totalorder %s40, %s56
      %p58 = scmp.eq.s32.totalorder %s32, 0
      %p59 = por %p57, %p58
      %s60 = ssub.s32 %s26, %s33
      %p61 = scmp.eq.s32.totalorder %s60, 0
      %s63 = sadd.s32 %s62, 1
      %s64 = scalar_select %p61, %s62, %s63
      %p67 = pneg %p61
      %p68 = scmp.eq.s32.totalorder %s26, 1
      %p69 = por %p67, %p68
      %p70 = scmp.ne.s32.totalorder %s62, %s65
      %p71 = scmp.eq.s32.totalorder %s26, 0
      %p72 = por %p70, %p71
      %p73 = scmp.ne.s32.totalorder %s62, %s65
      %p74 = scmp.eq.s32.totalorder %s31, 1
      %p75 = por %p73, %p74
      %p76 = scmp.ne.s32.totalorder %s65, %s66
      %p77 = scmp.eq.s32.totalorder %s31, 0
      %p78 = por %p76, %p77
      %p79 = scmp.ne.s32.totalorder %s65, %s66
      %p80 = scmp.eq.s32.totalorder %s32, 1
      %p81 = por %p79, %p80
      %p83 = scmp.ne.s32.totalorder %s66, %s82
      %p84 = scmp.eq.s32.totalorder %s32, 0
      %p85 = por %p83, %p84
      %s86 = ssub.s32 %s26, %s33
      %p87 = scmp.eq.s32.totalorder %s86, 0
      %s89 = sadd.s32 %s88, 1
      %s90 = scalar_select %p87, %s88, %s89
      %p93 = pneg %p87
      %p94 = scmp.eq.s32.totalorder %s26, 1
      %p95 = por %p93, %p94
      %p96 = scmp.ne.s32.totalorder %s88, %s91
      %p97 = scmp.eq.s32.totalorder %s26, 0
      %p98 = por %p96, %p97
      %p99 = scmp.ne.s32.totalorder %s88, %s91
      %p100 = scmp.eq.s32.totalorder %s31, 1
      %p101 = por %p99, %p100
      %p102 = scmp.ne.s32.totalorder %s91, %s92
      %p103 = scmp.eq.s32.totalorder %s31, 0
      %p104 = por %p102, %p103
      %p105 = scmp.ne.s32.totalorder %s91, %s92
      %p106 = scmp.eq.s32.totalorder %s32, 1
      %p107 = por %p105, %p106
      %p109 = scmp.ne.s32.totalorder %s92, %s108
      %p110 = scmp.eq.s32.totalorder %s32, 0
      %p111 = por %p109, %p110
      %s113 = sadd.s32 %s112, 1
      %p116 = scmp.eq.s32.totalorder %s26, 1
      %p117 = scmp.ne.s32.totalorder %s112, %s114
      %p118 = scmp.eq.s32.totalorder %s26, 0
      %p119 = por %p117, %p118
      %p120 = scmp.ne.s32.totalorder %s112, %s114
      %p121 = scmp.eq.s32.totalorder %s31, 1
      %p122 = por %p120, %p121
      %p123 = scmp.ne.s32.totalorder %s114, %s115
      %p124 = scmp.eq.s32.totalorder %s31, 0
      %p125 = por %p123, %p124
      %p126 = scmp.ne.s32.totalorder %s114, %s115
      %p127 = scmp.eq.s32.totalorder %s32, 1
      %p128 = por %p126, %p127
      %p130 = scmp.ne.s32.totalorder %s115, %s129
      %p131 = scmp.eq.s32.totalorder %s32, 0
      %p132 = por %p130, %p131
      %s134 = sadd.s32 %s133, 1
      %p137 = scmp.eq.s32.totalorder %s26, 1
      %p138 = scmp.ne.s32.totalorder %s133, %s135
      %p139 = scmp.eq.s32.totalorder %s26, 0
      %p140 = por %p138, %p139
      %p141 = scmp.ne.s32.totalorder %s133, %s135
      %p142 = scmp.eq.s32.totalorder %s31, 1
      %p143 = por %p141, %p142
      %p144 = scmp.ne.s32.totalorder %s135, %s136
      %p145 = scmp.eq.s32.totalorder %s31, 0
      %p146 = por %p144, %p145
      %p147 = scmp.ne.s32.totalorder %s135, %s136
      %p148 = scmp.eq.s32.totalorder %s32, 1
      %p149 = por %p147, %p148
      %p151 = scmp.ne.s32.totalorder %s136, %s150
      %p152 = scmp.eq.s32.totalorder %s32, 0
      %p153 = por %p151, %p152
      %s154 = ssub.s32 %s26, %s33
      %p155 = scmp.eq.s32.totalorder %s154, 0
      %s157 = sadd.s32 %s156, 1
      %s158 = scalar_select %p155, %s156, %s157
      %p161 = pneg %p155
      %p162 = scmp.eq.s32.totalorder %s26, 1
      %p163 = por %p161, %p162
      %p164 = scmp.ne.s32.totalorder %s156, %s159
      %p165 = scmp.eq.s32.totalorder %s26, 0
      %p166 = por %p164, %p165
      %p167 = scmp.ne.s32.totalorder %s156, %s159
      %p168 = scmp.eq.s32.totalorder %s31, 1
      %p169 = por %p167, %p168
      %p170 = scmp.ne.s32.totalorder %s159, %s160
      %p171 = scmp.eq.s32.totalorder %s31, 0
      %p172 = por %p170, %p171
      %p173 = scmp.ne.s32.totalorder %s159, %s160
      %p174 = scmp.eq.s32.totalorder %s32, 1
      %p175 = por %p173, %p174
      %p177 = scmp.ne.s32.totalorder %s160, %s176
      %p178 = scmp.eq.s32.totalorder %s32, 0
      %p179 = por %p177, %p178
      %s180 = ssub.s32 %s26, %s33
      %p181 = scmp.eq.s32.totalorder %s180, 0
      %s183 = sadd.s32 %s182, 1
      %s184 = scalar_select %p181, %s182, %s183
      %p187 = pneg %p181
      %p188 = scmp.eq.s32.totalorder %s26, 1
      %p189 = por %p187, %p188
      %p190 = scmp.ne.s32.totalorder %s182, %s185
      %p191 = scmp.eq.s32.totalorder %s26, 0
      %p192 = por %p190, %p191
      %p193 = scmp.ne.s32.totalorder %s182, %s185
      %p194 = scmp.eq.s32.totalorder %s31, 1
      %p195 = por %p193, %p194
      %p196 = scmp.ne.s32.totalorder %s185, %s186
      %p197 = scmp.eq.s32.totalorder %s31, 0
      %p198 = por %p196, %p197
      %p199 = scmp.ne.s32.totalorder %s185, %s186
      %p200 = scmp.eq.s32.totalorder %s32, 1
      %p201 = por %p199, %p200
      %p203 = scmp.ne.s32.totalorder %s186, %s202
      %p204 = scmp.eq.s32.totalorder %s32, 0
      %p205 = por %p203, %p204
      %p206 = scmp.le.s32.totalorder 1, %s26
      %p207 = scmp.lt.s32.totalorder %s26, 3
      %p208 = pnand %p206, %p207
      %p209 = pneg %p208
      // Predicated region
      $region9: #{tpu_custom_call.1} parent=5 // pred_check
        _
      $region10: #{tpu_custom_call.1} parent=5 // pred_check_branch
        %211 = sbr.rel (%p208) target = $region12
      $region11: #{tpu_custom_call.1} parent=5 // pred_region
        %s212 = ssub.s32 %s26, 1
        // Predicated region
        $region13: #{tpu_custom_call.1} parent=11 // pred_check
          %p213 = pneg %p125
        $region14: #{tpu_custom_call.1} parent=11 // pred_check_branch
          %215 = sbr.rel (%p213) target = $region16
        $region15: #{tpu_custom_call.1} parent=11 // pred_region
          %217 = vsyncadd [#allocation9], 0
          %s218 = sshll.u32 %s3, 4
          %s219 = int_to_ptr.hbm [resolvable:$true] %s218
          %s220 = sshll.u32 [#allocation8], 4
          %s221 = int_to_ptr.vmem [resolvable:$true] %s220
          %226 = dma.hbm_to_vmem [thread:$0]  %s219, 512, %s221, [#allocation9], 128, 128, 8
        $region16: #{tpu_custom_call.1} parent=11 // pred_fallthru
          _
        // Predicated region
        $region17: #{tpu_custom_call.1} parent=11 // pred_check
          %p227 = pneg %p146
        $region18: #{tpu_custom_call.1} parent=11 // pred_check_branch
          %229 = sbr.rel (%p227) target = $region20
        $region19: #{tpu_custom_call.1} parent=11 // pred_region
          %231 = vsyncadd [#allocation9], 0
          %s232 = sshll.u32 %s4, 4
          %s233 = int_to_ptr.hbm [resolvable:$true] %s232
          %s234 = sshll.u32 [#allocation10], 4
          %s235 = int_to_ptr.vmem [resolvable:$true] %s234
          %240 = dma.hbm_to_vmem [thread:$0]  %s233, 512, %s235, [#allocation9], 128, 128, 8
        $region20: #{tpu_custom_call.1} parent=11 // pred_fallthru
          _
      $region12: #{tpu_custom_call.1} parent=5 // pred_fallthru
        _
      %p241 = scmp.lt.s32.totalorder %s26, 2
      // Predicated region
      $region21: #{tpu_custom_call.1} parent=5 // pred_check
        %p242 = pneg %p241
      $region22: #{tpu_custom_call.1} parent=5 // pred_check_branch
        %244 = sbr.rel (%p242) target = $region24
      $region23: #{tpu_custom_call.1} parent=5 // pred_region
        // Predicated region
        $region25: #{tpu_custom_call.1} parent=23 // pred_check
          %p245 = pneg %p46
        $region26: #{tpu_custom_call.1} parent=23 // pred_check_branch
          %247 = sbr.rel (%p245) target = $region28
        $region27: #{tpu_custom_call.1} parent=23 // pred_region
          %s248 = sand.u32 %s36, 1
          %s249 = scalar_lea.sflag [#allocation3], %s248
          %s250 = sand.u32 %s36, 1
          %s251 = scalar_lea.vmem [#allocation2], %s250
          %253 = vsyncadd %s249, 0
          %s254 = scalar_lea.hbm %s0, %s26
          %s256 = sshll.u32 %s254, 4
          %s257 = int_to_ptr.hbm [resolvable:$true] %s256
          %s258 = sshll.u32 %s251, 4
          %s259 = int_to_ptr.vmem [resolvable:$true] %s258
          %261 = dma.hbm_to_vmem [thread:$0]  %s257, 16, %s259, %s249
        $region28: #{tpu_custom_call.1} parent=23 // pred_fallthru
          _
        // Predicated region
        $region29: #{tpu_custom_call.1} parent=23 // pred_check
          %p262 = pneg %p72
        $region30: #{tpu_custom_call.1} parent=23 // pred_check_branch
          %264 = sbr.rel (%p262) target = $region32
        $region31: #{tpu_custom_call.1} parent=23 // pred_region
          %s265 = sand.u32 %s26, 1
          %s266 = scalar_lea.sflag [#allocation6], %s265
          %s267 = sand.u32 %s62, 1
          %s268 = scalar_lea.vmem [#allocation5], %s267
          %270 = vsyncadd %s266, 0
          %s271 = scalar_lea.hbm %s1, %s26
          %s273 = sshll.u32 %s271, 4
          %s274 = int_to_ptr.hbm [resolvable:$true] %s273
          %s275 = sshll.u32 %s268, 4
          %s276 = int_to_ptr.vmem [resolvable:$true] %s275
          %278 = dma.hbm_to_vmem [thread:$0]  %s274, 16, %s276, %s266
        $region32: #{tpu_custom_call.1} parent=23 // pred_fallthru
          _
        // Predicated region
        $region33: #{tpu_custom_call.1} parent=23 // pred_check
          %p279 = pneg %p98
        $region34: #{tpu_custom_call.1} parent=23 // pred_check_branch
          %281 = sbr.rel (%p279) target = $region36
        $region35: #{tpu_custom_call.1} parent=23 // pred_region
          %s282 = sand.u32 %s26, 1
          %s283 = scalar_lea.sflag [#allocation6], %s282
          %s284 = sand.u32 %s88, 1
          %s285 = scalar_lea.vmem [#allocation7], %s284
          %287 = vsyncadd %s283, 0
          %s288 = scalar_lea.hbm %s2, %s26
          %s290 = sshll.u32 %s288, 4
          %s291 = int_to_ptr.hbm [resolvable:$true] %s290
          %s292 = sshll.u32 %s285, 4
          %s293 = int_to_ptr.vmem [resolvable:$true] %s292
          %295 = dma.hbm_to_vmem [thread:$0]  %s291, 16, %s293, %s283
        $region36: #{tpu_custom_call.1} parent=23 // pred_fallthru
          _
      $region24: #{tpu_custom_call.1} parent=5 // pred_fallthru
        _
      %p296 = scmp.le.s32.totalorder 1, %s26
      %p297 = scmp.lt.s32.totalorder %s26, 3
      %p298 = pnand %p296, %p297
      %p299 = pneg %p298
      // Predicated region
      $region37: #{tpu_custom_call.1} parent=5 // pred_check
        _
      $region38: #{tpu_custom_call.1} parent=5 // pred_check_branch
        %301 = sbr.rel (%p298) target = $region40
      $region39: #{tpu_custom_call.1} parent=5 // pred_region
        %s302 = ssub.s32 %s26, 1
        %s303 = sand.u32 %s39, 1
        %s304 = scalar_lea.sflag [#allocation3], %s303
        %s305 = sand.u32 %s39, 1
        %s306 = scalar_lea.vmem [#allocation2], %s305
        // Predicated region
        $region41: #{tpu_custom_call.1} parent=39 // pred_check
          %p307 = pneg %p52
        $region42: #{tpu_custom_call.1} parent=39 // pred_check_branch
          %309 = sbr.rel (%p307) target = $region44
        $region43: #{tpu_custom_call.1} parent=39 // pred_region
          %311 = dma.done %s304, 16
        $region44: #{tpu_custom_call.1} parent=39 // pred_fallthru
          _
        %s312 = sand.u32 %s31, 1
        %s313 = scalar_lea.sflag [#allocation6], %s312
        %s314 = sand.u32 %s65, 1
        %s315 = scalar_lea.vmem [#allocation5], %s314
        // Predicated region
        $region45: #{tpu_custom_call.1} parent=39 // pred_check
          %p316 = pneg %p78
        $region46: #{tpu_custom_call.1} parent=39 // pred_check_branch
          %318 = sbr.rel (%p316) target = $region48
        $region47: #{tpu_custom_call.1} parent=39 // pred_region
          %320 = dma.done %s313, 16
        $region48: #{tpu_custom_call.1} parent=39 // pred_fallthru
          _
        %s321 = sand.u32 %s31, 1
        %s322 = scalar_lea.sflag [#allocation6], %s321
        %s323 = sand.u32 %s91, 1
        %s324 = scalar_lea.vmem [#allocation7], %s323
        // Predicated region
        $region49: #{tpu_custom_call.1} parent=39 // pred_check
          %p325 = pneg %p104
        $region50: #{tpu_custom_call.1} parent=39 // pred_check_branch
          %327 = sbr.rel (%p325) target = $region52
        $region51: #{tpu_custom_call.1} parent=39 // pred_region
          %329 = dma.done %s322, 16
        $region52: #{tpu_custom_call.1} parent=39 // pred_fallthru
          _
        // Predicated region
        $region53: #{tpu_custom_call.1} parent=39 // pred_check
          %p330 = pneg %p125
        $region54: #{tpu_custom_call.1} parent=39 // pred_check_branch
          %332 = sbr.rel (%p330) target = $region56
        $region55: #{tpu_custom_call.1} parent=39 // pred_region
          %334 = dma.done [#allocation9], 512
        $region56: #{tpu_custom_call.1} parent=39 // pred_fallthru
          _
        // Predicated region
        $region57: #{tpu_custom_call.1} parent=39 // pred_check
          %p335 = pneg %p146
        $region58: #{tpu_custom_call.1} parent=39 // pred_check_branch
          %337 = sbr.rel (%p335) target = $region60
        $region59: #{tpu_custom_call.1} parent=39 // pred_region
          %339 = dma.done [#allocation9], 512
        $region60: #{tpu_custom_call.1} parent=39 // pred_fallthru
          _
        %s340 = sand.u32 %s39, 1
        %s341 = scalar_lea.sflag [#allocation3], %s340
        %s342 = sand.u32 %s39, 1
        %s343 = scalar_lea.vmem [#allocation2], %s342
        %p344 = pneg %p52
        %p345 = pneg %p49
        %s346 = sand.u32 %s31, 1
        %s347 = scalar_lea.sflag [#allocation6], %s346
        %s348 = sand.u32 %s65, 1
        %s349 = scalar_lea.vmem [#allocation5], %s348
        %p350 = pneg %p78
        %p351 = pneg %p75
        %s352 = sand.u32 %s31, 1
        %s353 = scalar_lea.sflag [#allocation6], %s352
        %s354 = sand.u32 %s91, 1
        %s355 = scalar_lea.vmem [#allocation7], %s354
        %p356 = pneg %p104
        %p357 = pneg %p101
        %p358 = pneg %p125
        %p359 = pneg %p122
        %p360 = pneg %p146
        %p361 = pneg %p143
        %p362 = pneg %p172
        %p363 = pneg %p169
        %s364 = sand.u32 %s159, 1
        %s365 = scalar_lea.sflag [#allocation4], %s364
        %s366 = sand.u32 %s159, 1
        %s367 = scalar_lea.vmem [#allocation11], %s366
        %p368 = pneg %p198
        %p369 = pneg %p195
        %s370 = sand.u32 %s185, 1
        %s371 = scalar_lea.sflag [#allocation13], %s370
        %s372 = sand.u32 %s185, 1
        %s373 = scalar_lea.vmem [#allocation12], %s372
        %v374 = vld [vmem:[%s306] sm:$0x1]
        %v375 = vld [vmem:[%s315] sm:$0x1]
        %v376 = vld [vmem:[%s324] sm:$0x1]
        %v377 = vld [vmem:[#allocation8] sm:$0xff]
        %v378 = vld [vmem:[#allocation8 + $0x8] sm:$0xff]
        %v379 = vld [vmem:[#allocation8 + $0x10] sm:$0xff]
        %v380 = vld [vmem:[#allocation8 + $0x18] sm:$0xff]
        %v381 = vld [vmem:[#allocation10] sm:$0xff]
        %v382 = vld [vmem:[#allocation10 + $0x8] sm:$0xff]
        %v383 = vld [vmem:[#allocation10 + $0x10] sm:$0xff]
        %v384 = vld [vmem:[#allocation10 + $0x18] sm:$0xff]
        %v385 = vlaneseq
        %v386 = vshrl.u32 %v385, 7
        %v387 = vadd.s32 %v386, 8
        %v388 = vadd.s32 %v386, 16
        %v389 = vadd.s32 %v386, 24
        %v390 = vadd.s32 %v386, 32
        %v391 = vadd.s32 %v386, 40
        %v392 = vadd.s32 %v386, 48
        %v393 = vadd.s32 %v386, 56
        %v394 = vperm.slane %v374, 0
        %vm395 = vcmp.eq.s32.totalorder %v386, %v394
        %vm396 = vcmp.eq.s32.totalorder %v387, %v394
        %vm397 = vcmp.eq.s32.totalorder %v388, %v394
        %vm398 = vcmp.eq.s32.totalorder %v389, %v394
        %vm399 = vcmp.eq.s32.totalorder %v390, %v394
        %vm400 = vcmp.eq.s32.totalorder %v391, %v394
        %vm401 = vcmp.eq.s32.totalorder %v392, %v394
        %vm402 = vcmp.eq.s32.totalorder %v393, %v394
        %v403 = vsel %vm395, 1, 0
        %v404 = vsel %vm396, 1, 0
        %v405 = vsel %vm397, 1, 0
        %v406 = vsel %vm398, 1, 0
        %v407 = vsel %vm399, 1, 0
        %v408 = vsel %vm400, 1, 0
        %v409 = vsel %vm401, 1, 0
        %v410 = vsel %vm402, 1, 0
        %v411 = vcvt.s32.f32 %v403
        %v412 = vcvt.s32.f32 %v404
        %v413 = vcvt.s32.f32 %v405
        %v414 = vcvt.s32.f32 %v406
        %v415 = vcvt.s32.f32 %v407
        %v416 = vcvt.s32.f32 %v408
        %v417 = vcvt.s32.f32 %v409
        %v418 = vcvt.s32.f32 %v410
        %vm419 = vcmask 523264
        %v421 = vsel %vm419, %v377, 0
        %v424 = vsel %vm419, %v378, 0
        %v427 = vsel %vm419, %v379, 0
        %v430 = vsel %vm419, %v380, 0
        %432 = vmatpush.msra.mxu0 0.0
        %433 = vmatpush.msra.mxu0 0.0
        %434 = vmatpush.msra.mxu0 0.0
        %435 = vmatpush.msra.mxu0 0.0
        %436 = vmatpush.msra.mxu0 0.0
        %437 = vmatpush.msra.mxu0 0.0
        %438 = vmatpush.msra.mxu0 0.0
        %439 = vmatpush.msra.mxu0 0.0
        %440 = vmatpush.msra.mxu0 %v418
        %441 = vmatpush.msra.mxu0 %v417
        %442 = vmatpush.msra.mxu0 %v416
        %443 = vmatpush.msra.mxu0 %v415
        %444 = vmatpush.msra.mxu0 %v414
        %445 = vmatpush.msra.mxu0 %v413
        %446 = vmatpush.msra.mxu0 %v412
        %447 = vmatpush.msra.mxu0 %v411
        %448 = vmatmul.f32.gmra.mxu0 %v421
        %v449 = vpop.f32.mrf.mxu0
        %v450 = vadd.f32 0.0, %v449
        %451 = vmatmul.f32.gmra.mxu0 %v424
        %v452 = vpop.f32.mrf.mxu0
        %v453 = vadd.f32 0.0, %v452
        %454 = vmatmul.f32.gmra.mxu0 %v427
        %v455 = vpop.f32.mrf.mxu0
        %v456 = vadd.f32 0.0, %v455
        %457 = vmatmul.f32.gmra.mxu0 %v430
        %v458 = vpop.f32.mrf.mxu0
        %v459 = vadd.f32 0.0, %v458
        %460 = vdwg.mxu0
        %v461 = vadd.s32 %v386, 64
        %v462 = vadd.s32 %v386, 72
        %v463 = vadd.s32 %v386, 80
        %v464 = vadd.s32 %v386, 88
        %v465 = vadd.s32 %v386, 96
        %v466 = vadd.s32 %v386, 104
        %v467 = vadd.s32 %v386, 112
        %v468 = vadd.s32 %v386, 120
        %v469 = vperm.slane %v375, 0
        %vm470 = vcmp.eq.s32.totalorder %v386, %v469
        %vm471 = vcmp.eq.s32.totalorder %v387, %v469
        %vm472 = vcmp.eq.s32.totalorder %v388, %v469
        %vm473 = vcmp.eq.s32.totalorder %v389, %v469
        %vm474 = vcmp.eq.s32.totalorder %v390, %v469
        %vm475 = vcmp.eq.s32.totalorder %v391, %v469
        %vm476 = vcmp.eq.s32.totalorder %v392, %v469
        %vm477 = vcmp.eq.s32.totalorder %v393, %v469
        %vm478 = vcmp.eq.s32.totalorder %v461, %v469
        %vm479 = vcmp.eq.s32.totalorder %v462, %v469
        %vm480 = vcmp.eq.s32.totalorder %v463, %v469
        %vm481 = vcmp.eq.s32.totalorder %v464, %v469
        %vm482 = vcmp.eq.s32.totalorder %v465, %v469
        %vm483 = vcmp.eq.s32.totalorder %v466, %v469
        %vm484 = vcmp.eq.s32.totalorder %v467, %v469
        %vm485 = vcmp.eq.s32.totalorder %v468, %v469
        %v486 = vsel %vm470, 1, 0
        %v487 = vsel %vm471, 1, 0
        %v488 = vsel %vm472, 1, 0
        %v489 = vsel %vm473, 1, 0
        %v490 = vsel %vm474, 1, 0
        %v491 = vsel %vm475, 1, 0
        %v492 = vsel %vm476, 1, 0
        %v493 = vsel %vm477, 1, 0
        %v494 = vsel %vm478, 1, 0
        %v495 = vsel %vm479, 1, 0
        %v496 = vsel %vm480, 1, 0
        %v497 = vsel %vm481, 1, 0
        %v498 = vsel %vm482, 1, 0
        %v499 = vsel %vm483, 1, 0
        %v500 = vsel %vm484, 1, 0
        %v501 = vsel %vm485, 1, 0
        %v502 = vcvt.s32.f32 %v486
        %v503 = vcvt.s32.f32 %v487
        %v504 = vcvt.s32.f32 %v488
        %v505 = vcvt.s32.f32 %v489
        %v506 = vcvt.s32.f32 %v490
        %v507 = vcvt.s32.f32 %v491
        %v508 = vcvt.s32.f32 %v492
        %v509 = vcvt.s32.f32 %v493
        %v510 = vcvt.s32.f32 %v494
        %v511 = vcvt.s32.f32 %v495
        %v512 = vcvt.s32.f32 %v496
        %v513 = vcvt.s32.f32 %v497
        %v514 = vcvt.s32.f32 %v498
        %v515 = vcvt.s32.f32 %v499
        %v516 = vcvt.s32.f32 %v500
        %v517 = vcvt.s32.f32 %v501
        %518 = vmatpush.msra.mxu0 %v517
        %519 = vmatpush.msra.mxu0 %v516
        %520 = vmatpush.msra.mxu0 %v515
        %521 = vmatpush.msra.mxu0 %v514
        %522 = vmatpush.msra.mxu0 %v513
        %523 = vmatpush.msra.mxu0 %v512
        %524 = vmatpush.msra.mxu0 %v511
        %525 = vmatpush.msra.mxu0 %v510
        %526 = vmatpush.msra.mxu0 %v509
        %527 = vmatpush.msra.mxu0 %v508
        %528 = vmatpush.msra.mxu0 %v507
        %529 = vmatpush.msra.mxu0 %v506
        %530 = vmatpush.msra.mxu0 %v505
        %531 = vmatpush.msra.mxu0 %v504
        %532 = vmatpush.msra.mxu0 %v503
        %533 = vmatpush.msra.mxu0 %v502
        %534 = vmatmul.f32.gmra.mxu0 %v381
        %v535 = vpop.f32.mrf.mxu0
        %v536 = vadd.f32 0.0, %v535
        %537 = vmatmul.f32.gmra.mxu0 %v382
        %v538 = vpop.f32.mrf.mxu0
        %v539 = vadd.f32 0.0, %v538
        %540 = vmatmul.f32.gmra.mxu0 %v383
        %v541 = vpop.f32.mrf.mxu0
        %v542 = vadd.f32 0.0, %v541
        %543 = vmatmul.f32.gmra.mxu0 %v384
        %v544 = vpop.f32.mrf.mxu0
        %v545 = vadd.f32 0.0, %v544
        %546 = vdwg.mxu0
        %v547 = vperm.slane %v376, 0
        %vm548 = vcmp.eq.s32.totalorder %v386, %v547
        %vm549 = vcmp.eq.s32.totalorder %v387, %v547
        %vm550 = vcmp.eq.s32.totalorder %v388, %v547
        %vm551 = vcmp.eq.s32.totalorder %v389, %v547
        %vm552 = vcmp.eq.s32.totalorder %v390, %v547
        %vm553 = vcmp.eq.s32.totalorder %v391, %v547
        %vm554 = vcmp.eq.s32.totalorder %v392, %v547
        %vm555 = vcmp.eq.s32.totalorder %v393, %v547
        %vm556 = vcmp.eq.s32.totalorder %v461, %v547
        %vm557 = vcmp.eq.s32.totalorder %v462, %v547
        %vm558 = vcmp.eq.s32.totalorder %v463, %v547
        %vm559 = vcmp.eq.s32.totalorder %v464, %v547
        %vm560 = vcmp.eq.s32.totalorder %v465, %v547
        %vm561 = vcmp.eq.s32.totalorder %v466, %v547
        %vm562 = vcmp.eq.s32.totalorder %v467, %v547
        %vm563 = vcmp.eq.s32.totalorder %v468, %v547
        %v564 = vsel %vm548, 1, 0
        %v565 = vsel %vm549, 1, 0
        %v566 = vsel %vm550, 1, 0
        %v567 = vsel %vm551, 1, 0
        %v568 = vsel %vm552, 1, 0
        %v569 = vsel %vm553, 1, 0
        %v570 = vsel %vm554, 1, 0
        %v571 = vsel %vm555, 1, 0
        %v572 = vsel %vm556, 1, 0
        %v573 = vsel %vm557, 1, 0
        %v574 = vsel %vm558, 1, 0
        %v575 = vsel %vm559, 1, 0
        %v576 = vsel %vm560, 1, 0
        %v577 = vsel %vm561, 1, 0
        %v578 = vsel %vm562, 1, 0
        %v579 = vsel %vm563, 1, 0
        %v580 = vcvt.s32.f32 %v564
        %v581 = vcvt.s32.f32 %v565
        %v582 = vcvt.s32.f32 %v566
        %v583 = vcvt.s32.f32 %v567
        %v584 = vcvt.s32.f32 %v568
        %v585 = vcvt.s32.f32 %v569
        %v586 = vcvt.s32.f32 %v570
        %v587 = vcvt.s32.f32 %v571
        %v588 = vcvt.s32.f32 %v572
        %v589 = vcvt.s32.f32 %v573
        %v590 = vcvt.s32.f32 %v574
        %v591 = vcvt.s32.f32 %v575
        %v592 = vcvt.s32.f32 %v576
        %v593 = vcvt.s32.f32 %v577
        %v594 = vcvt.s32.f32 %v578
        %v595 = vcvt.s32.f32 %v579
        %596 = vmatpush.msra.mxu0 %v595
        %597 = vmatpush.msra.mxu0 %v594
        %598 = vmatpush.msra.mxu0 %v593
        %599 = vmatpush.msra.mxu0 %v592
        %600 = vmatpush.msra.mxu0 %v591
        %601 = vmatpush.msra.mxu0 %v590
        %602 = vmatpush.msra.mxu0 %v589
        %603 = vmatpush.msra.mxu0 %v588
        %604 = vmatpush.msra.mxu0 %v587
        %605 = vmatpush.msra.mxu0 %v586
        %606 = vmatpush.msra.mxu0 %v585
        %607 = vmatpush.msra.mxu0 %v584
        %608 = vmatpush.msra.mxu0 %v583
        %609 = vmatpush.msra.mxu0 %v582
        %610 = vmatpush.msra.mxu0 %v581
        %611 = vmatpush.msra.mxu0 %v580
        %612 = vmatmul.f32.gmra.mxu0 %v381
        %v613 = vpop.f32.mrf.mxu0
        %v614 = vadd.f32 0.0, %v613
        %615 = vmatmul.f32.gmra.mxu0 %v382
        %v616 = vpop.f32.mrf.mxu0
        %v617 = vadd.f32 0.0, %v616
        %618 = vmatmul.f32.gmra.mxu0 %v383
        %v619 = vpop.f32.mrf.mxu0
        %v620 = vadd.f32 0.0, %v619
        %621 = vmatmul.f32.gmra.mxu0 %v384
        %v622 = vpop.f32.mrf.mxu0
        %v623 = vadd.f32 0.0, %v622
        %624 = vdwg.mxu0
        %v625 = vmul.f32 %v450, %v536
        %v626 = vmul.f32 %v453, %v539
        %v627 = vmul.f32 %v456, %v542
        %v628 = vmul.f32 %v459, %v545
        %v629 = vadd.f32 %v625, %v626
        %v630 = vadd.f32 %v629, %v627
        %v631 = vadd.f32 %v630, %v628
        %v632 = vrot.slane %v631, 4
        %v633 = vadd.f32 %v631, %v632
        %v634 = vrot.slane %v633, 2
        %v635 = vadd.f32 %v633, %v634
        %v636 = vrot.slane %v635, 1
        %v637 = vadd.f32 %v635, %v636
        %638 = vst [vmem:[%s367] sm:$0x1] %v637
        %v639 = vmul.f32 %v450, %v614
        %v640 = vmul.f32 %v453, %v617
        %v641 = vmul.f32 %v456, %v620
        %v642 = vmul.f32 %v459, %v623
        %v643 = vadd.f32 %v639, %v640
        %v644 = vadd.f32 %v643, %v641
        %v645 = vadd.f32 %v644, %v642
        %v646 = vrot.slane %v645, 4
        %v647 = vadd.f32 %v645, %v646
        %v648 = vrot.slane %v647, 2
        %v649 = vadd.f32 %v647, %v648
        %v650 = vrot.slane %v649, 1
        %v651 = vadd.f32 %v649, %v650
        %652 = vst [vmem:[%s373] sm:$0x1] %v651
        %s653 = sand.u32 %s159, 1
        %s654 = scalar_lea.sflag [#allocation4], %s653
        %s655 = sand.u32 %s159, 1
        %s656 = scalar_lea.vmem [#allocation11], %s655
        %s657 = sand.u32 %s185, 1
        %s658 = scalar_lea.sflag [#allocation13], %s657
        %s659 = sand.u32 %s185, 1
        %s660 = scalar_lea.vmem [#allocation12], %s659
        // Predicated region
        $region61: #{tpu_custom_call.1} parent=39 // pred_check
          %p661 = pneg %p169
        $region62: #{tpu_custom_call.1} parent=39 // pred_check_branch
          %663 = sbr.rel (%p661) target = $region64
        $region63: #{tpu_custom_call.1} parent=39 // pred_region
          %665 = vsyncadd %s654, 0
          %s666 = scalar_lea.hbm %s5, %s31
          %s668 = sshll.u32 %s656, 4
          %s669 = int_to_ptr.vmem [resolvable:$true] %s668
          %s670 = sshll.u32 %s666, 4
          %s671 = int_to_ptr.hbm [resolvable:$true] %s670
          %673 = dma.vmem_to_hbm [thread:$0]  %s669, 16, %s671, %s654
        $region64: #{tpu_custom_call.1} parent=39 // pred_fallthru
          _
        // Predicated region
        $region65: #{tpu_custom_call.1} parent=39 // pred_check
          %p674 = pneg %p195
        $region66: #{tpu_custom_call.1} parent=39 // pred_check_branch
          %676 = sbr.rel (%p674) target = $region68
        $region67: #{tpu_custom_call.1} parent=39 // pred_region
          %678 = vsyncadd %s658, 0
          %s679 = scalar_lea.hbm %s6, %s31
          %s681 = sshll.u32 %s660, 4
          %s682 = int_to_ptr.vmem [resolvable:$true] %s681
          %s683 = sshll.u32 %s679, 4
          %s684 = int_to_ptr.hbm [resolvable:$true] %s683
          %686 = dma.vmem_to_hbm [thread:$0]  %s682, 16, %s684, %s658
        $region68: #{tpu_custom_call.1} parent=39 // pred_fallthru
          _
      $region40: #{tpu_custom_call.1} parent=5 // pred_fallthru
        _
      %p687 = scmp.le.s32.totalorder 2, %s26
      // Predicated region
      $region69: #{tpu_custom_call.1} parent=5 // pred_check
        %p688 = pneg %p687
      $region70: #{tpu_custom_call.1} parent=5 // pred_check_branch
        %690 = sbr.rel (%p688) target = $region72
      $region71: #{tpu_custom_call.1} parent=5 // pred_region
        %s691 = ssub.s32 %s26, 2
        // Predicated region
        $region73: #{tpu_custom_call.1} parent=71 // pred_check
          %p692 = pneg %p175
        $region74: #{tpu_custom_call.1} parent=71 // pred_check_branch
          %694 = sbr.rel (%p692) target = $region76
        $region75: #{tpu_custom_call.1} parent=71 // pred_region
          %s695 = sand.u32 %s160, 1
          %s696 = scalar_lea.sflag [#allocation4], %s695
          %s697 = sand.u32 %s160, 1
          %s698 = scalar_lea.vmem [#allocation11], %s697
          %700 = dma.done %s696, 16
        $region76: #{tpu_custom_call.1} parent=71 // pred_fallthru
          _
        // Predicated region
        $region77: #{tpu_custom_call.1} parent=71 // pred_check
          %p701 = pneg %p201
        $region78: #{tpu_custom_call.1} parent=71 // pred_check_branch
          %703 = sbr.rel (%p701) target = $region80
        $region79: #{tpu_custom_call.1} parent=71 // pred_region
          %s704 = sand.u32 %s186, 1
          %s705 = scalar_lea.sflag [#allocation13], %s704
          %s706 = sand.u32 %s186, 1
          %s707 = scalar_lea.vmem [#allocation12], %s706
          %709 = dma.done %s705, 16
        $region80: #{tpu_custom_call.1} parent=71 // pred_fallthru
          _
      $region72: #{tpu_custom_call.1} parent=5 // pred_fallthru
        _
    $region6: #{tpu_custom_call.1} parent=1 // loop_footer
      %s30 = sadd.s32 1, %s26
    $region7: #{tpu_custom_call.1} parent=1 // loop_footer_branch
      %25 = sbr.rel target = $region3
    $region8: #{tpu_custom_call.1} parent=1 // loop_exit
      _
    %710 = vsyncpa [#allocation3], 1
    %s711 = scalar_lea.sflag [#allocation3], 1
    %712 = vsyncpa %s711, 1
    %713 = vsyncpa [#allocation6], 1
    %s714 = scalar_lea.sflag [#allocation6], 1
    %715 = vsyncpa %s714, 1
    %716 = vsyncpa [#allocation9], 1
    %717 = vsyncpa [#allocation4], 1
    %s718 = scalar_lea.sflag [#allocation4], 1
    %719 = vsyncpa %s718, 1
    %720 = vsyncpa [#allocation13], 1
    %s721 = scalar_lea.sflag [#allocation13], 1
    %722 = vsyncpa %s721, 1

</llo_original>
